<compile_context>
chip_gen: v7x
topology: tpu7x:2x2x1
jax: 0.10.0
libtpu: 0.0.40
codegen_flags: <defaults>
</compile_context>

<pallas_src>
import jax
import jax.numpy as jnp
import numpy as np
from jax.experimental import pallas as pl
from jax.experimental.pallas import tpu as pltpu


def channel_att_kernel(coef_ref, x_ref, o_ref):
    """coef_ref: (2, Rb, 1) packed [scale; bias] per row.  x_ref/o_ref: (Rb, Sb)."""
    coef = coef_ref[...]
    a = coef[0]                                # (Rb, 1) per-row scale
    b = coef[1]                                # (Rb, 1) per-row bias
    x = x_ref[...]
    xf = x.astype(jnp.float32)
    t = xf * a + b                             # folded BN + |gamma| weight
    if o_ref.dtype == jnp.float32:
        gate = jax.nn.sigmoid(t)               # exact path for f32
    else:
        # bf16/f16 inputs: bf16 EUP exp + approx reciprocal keeps the kernel
        # HBM-bound on v6e/v7x instead of EUP-bound.
        e = jnp.exp(-(t.astype(o_ref.dtype)))
        gate = pl.reciprocal(1.0 + e.astype(jnp.float32), approx=True)
    o_ref[...] = (xf * gate).astype(o_ref.dtype)


def _choose_tiles(R, S, itemsize, budget_bytes):
    """Pick a (rows, lanes) block for the flattened (R, S) view.

    Prefers full-S blocks (one contiguous HBM run per block) and tiles rows in
    multiples of 8 that divide R.  Only tiles S (multiples of 128) when even
    the minimum legal row tile at full S exceeds the budget.  Never returns a
    "largest non-fitting" block.
    """
    def fits(rb, sb):
        return rb * sb * itemsize <= budget_bytes

    rb_min = 8 if R % 8 == 0 else R            # smallest legal row tile

    # Preferred: contiguous full-S blocks, as many rows as the budget allows.
    if fits(rb_min, S):
        if R % 8 == 0:
            target = max(8, (budget_bytes // (S * itemsize)) // 8 * 8)
            rb = min(R, target)
            while R % rb != 0:                 # shrink to a dividing multiple of 8
                rb -= 8
        else:
            rb = R                             # full-extent rows (legal for any R)
        return rb, S

    # Full-S slab too big even at the minimum row tile: tile the lane axis.
    if S % 128 == 0:
        sb = 128
        cand = 128
        while cand <= S:
            if S % cand == 0 and fits(rb_min, cand):
                sb = cand
            cand += 128
        return rb_min, sb

    # S not 128-aligned and huge: cannot tile lanes legally; accept the big
    # block (wrapper raises vmem_limit_bytes accordingly).  Stores are masked.
    return rb_min, S


def channel_att(x, gamma, beta, running_mean, running_var, *, eps=1e-5,
                block_budget_bytes=8 * 1024 * 1024):
    """Channel_Att forward. x: (N, C, H, W); BN params: (C,) each."""
    N, C, H, W = x.shape
    R = N * C
    S = H * W

    # ---- fold eval-mode BN + normalized |gamma| weight into (a, b) ----
    # TODO(synk): training-mode BatchNorm (batch statistics) is not implemented;
    # eval-mode running stats are folded here, which is the inference semantics.
    g = gamma.astype(jnp.float32)
    inv_std = jax.lax.rsqrt(running_var.astype(jnp.float32) + eps)
    wbn = jnp.abs(g) / jnp.sum(jnp.abs(g))     # NaN if sum==0 (matches PyTorch)
    a_c = wbn * g * inv_std
    b_c = wbn * (beta.astype(jnp.float32)
                 - running_mean.astype(jnp.float32) * g * inv_std)

    # Per-row coefficients for the flattened (N*C, S) view (row = n*C + c).
    a_r = jnp.tile(a_c, N)
    b_r = jnp.tile(b_c, N)
    coef = jnp.stack([a_r, b_r], axis=0).reshape(2, R, 1)

    # ---- flattened lane-dense view: (N*C, H*W) ----
    x2 = x.reshape(R, S)
    itemsize = x2.dtype.itemsize

    Rb, Sb = _choose_tiles(R, S, itemsize, block_budget_bytes)
    block_bytes = Rb * Sb * itemsize
    # in + out, double-buffered, plus coef and some margin.
    vmem_limit = int(max(32 * 1024 * 1024,
                         4 * block_bytes + 4 * Rb * 2 * 4 + 4 * 1024 * 1024))

    grid = (R // Rb, S // Sb)

    out = pl.pallas_call(
        channel_att_kernel,
        out_shape=jax.ShapeDtypeStruct((R, S), x.dtype),
        grid_spec=pltpu.PrefetchScalarGridSpec(
            num_scalar_prefetch=0,
            grid=grid,
            in_specs=[
                pl.BlockSpec((2, Rb, 1), lambda i, j: (0, i, 0)),  # coef
                pl.BlockSpec((Rb, Sb), lambda i, j: (i, j)),       # x
            ],
            out_specs=pl.BlockSpec((Rb, Sb), lambda i, j: (i, j)),
        ),
        compiler_params=pltpu.CompilerParams(
            dimension_semantics=("parallel", "parallel"),
            vmem_limit_bytes=vmem_limit,
        ),
    )(coef, x2)

    return out.reshape(N, C, H, W)


def channel_att_reference(x, gamma, beta, running_mean, running_var, eps=1e-5):
    """Pure-JAX reference mirroring the PyTorch forward (eval-mode BN)."""
    g = gamma.astype(jnp.float32)
    inv_std = jax.lax.rsqrt(running_var.astype(jnp.float32) + eps)
    x_bn = ((x - running_mean[None, :, None, None])
            * (g * inv_std)[None, :, None, None]
            + beta[None, :, None, None])
    wbn = jnp.abs(g) / jnp.sum(jnp.abs(g))
    y = x_bn * wbn[None, :, None, None]
    return jax.nn.sigmoid(y) * x


if __name__ == "__main__":
    key = jax.random.PRNGKey(0)
    kx, kg, kb, km, kv = jax.random.split(key, 5)

    N, C, H, W = 2, 4, 16, 16
    x = jax.random.normal(kx, (N, C, H, W), jnp.float32)
    gamma = 1.0 + 0.3 * jax.random.normal(kg, (C,), jnp.float32)
    beta = 0.1 * jax.random.normal(kb, (C,), jnp.float32)
    running_mean = 0.1 * jax.random.normal(km, (C,), jnp.float32)
    running_var = 1.0 + 0.1 * jax.random.uniform(kv, (C,), jnp.float32)

    out = channel_att(x, gamma, beta, running_mean, running_var)
    out = jax.block_until_ready(out)

    ref = channel_att_reference(x, gamma, beta, running_mean, running_var)
    np.testing.assert_allclose(np.asarray(out), np.asarray(ref),
                               rtol=1e-5, atol=1e-5)

    print("KERNEL_OK")
</pallas_src>

<mosaic_0001>
module attributes {stable_mosaic.version = 11 : i64} {
  func.func @channel_att_kernel(%arg0: i32, %arg1: i32, %arg2: memref<2x8x1xf32, #tpu.memory_space<vmem>>, %arg3: memref<8x256xf32, #tpu.memory_space<vmem>>, %arg4: memref<8x256xf32, #tpu.memory_space<vmem>>) attributes {dimension_semantics = [#tpu.dimension_semantics<parallel>, #tpu.dimension_semantics<parallel>], iteration_bounds = array<i64: 1, 1>, scalar_prefetch = 0 : i64, scratch_operands = 0 : i64, tpu.core_type = #tpu.core_type<tc>, window_params = [{transform_indices = @transform_0, window_bounds = array<i64: 2, 8, 1>}, {transform_indices = @transform_1, window_bounds = array<i64: 8, 256>}, {transform_indices = @transform_2, window_bounds = array<i64: 8, 256>}]} {
    %c0 = arith.constant 0 : index
    %c0_0 = arith.constant 0 : index
    %c0_1 = arith.constant 0 : index
    %0 = vector.load %arg2[%c0, %c0_0, %c0_1] : memref<2x8x1xf32, #tpu.memory_space<vmem>>, vector<2x8x1xf32>
    %1 = vector.extract_strided_slice %0 {offsets = [0, 0, 0], sizes = [1, 8, 1], strides = [1, 1, 1]} : vector<2x8x1xf32> to vector<1x8x1xf32>
    %2 = vector.shape_cast %1 : vector<1x8x1xf32> to vector<8x1xf32>
    %3 = vector.extract_strided_slice %0 {offsets = [1, 0, 0], sizes = [1, 8, 1], strides = [1, 1, 1]} : vector<2x8x1xf32> to vector<1x8x1xf32>
    %4 = vector.shape_cast %3 : vector<1x8x1xf32> to vector<8x1xf32>
    %c0_2 = arith.constant 0 : index
    %c0_3 = arith.constant 0 : index
    %5 = vector.load %arg3[%c0_2, %c0_3] : memref<8x256xf32, #tpu.memory_space<vmem>>, vector<8x256xf32>
    %6 = vector.broadcast %2 : vector<8x1xf32> to vector<8x256xf32>
    %7 = arith.mulf %5, %6 : vector<8x256xf32>
    %8 = vector.broadcast %4 : vector<8x1xf32> to vector<8x256xf32>
    %9 = arith.addf %7, %8 : vector<8x256xf32>
    %10 = arith.negf %9 : vector<8x256xf32>
    %11 = math.exp %10 : vector<8x256xf32>
    %cst = arith.constant 1.000000e+00 : f32
    %12 = vector.broadcast %cst : f32 to vector<8x256xf32>
    %13 = arith.addf %12, %11 : vector<8x256xf32>
    %14 = arith.divf %12, %13 : vector<8x256xf32>
    %15 = arith.mulf %5, %14 : vector<8x256xf32>
    %c0_4 = arith.constant 0 : index
    %c0_5 = arith.constant 0 : index
    %16 = vector.load %arg4[%c0_4, %c0_5] : memref<8x256xf32, #tpu.memory_space<vmem>>, vector<8x256xf32>
    tpu.vector_store %arg4[%c0_4, %c0_5], %15 {strides = array<i32>} : memref<8x256xf32, #tpu.memory_space<vmem>>, vector<8x256xf32>,
    return
  }
  func.func @transform_0(%arg0: i32, %arg1: i32) -> (i32, i32, i32) {
    %c0_i32 = arith.constant 0 : i32
    %c0_i32_0 = arith.constant 0 : i32
    %c0_i32_1 = arith.constant 0 : i32
    return %c0_i32, %arg0, %c0_i32_0 : i32, i32, i32
  }
  func.func @transform_1(%arg0: i32, %arg1: i32) -> (i32, i32) {
    %c0_i32 = arith.constant 0 : i32
    return %arg0, %arg1 : i32, i32
  }
  func.func @transform_2(%arg0: i32, %arg1: i32) -> (i32, i32) {
    %c0_i32 = arith.constant 0 : i32
    return %arg0, %arg1 : i32, i32
  }
}

</mosaic_0001>

<llo_original>
// kernel: tpu_custom_call.1
$region0: #{tpu_custom_call.1}
  #allocation0 [shape = 'u32[]', space=smem, size = 0x4, offset = 0x4, fixed_abs, tag = 'smem constant byte address 0x4 - core index']
  #allocation1 [shape = 'u32[144,128]{1,0:T(1,128)}', space=vmem, size = 0x12000, scoped, tag = 'internal scratch']
  %s0 = inlined_call_operand.vmem [shape: f32[2,8,1], index: 0, kind: input, shape index: {}]
  %s1 = inlined_call_operand.vmem [shape: f32[8,256], index: 1, kind: input, shape index: {}]
  %s2 = inlined_call_operand.hbm [shape: f32[8,256], index: 2, kind: output, shape index: {}]
  %s3 = sld [smem:[#allocation0]]
  $region18: #{tpu_custom_call.1} parent=0
    _
  %s5 = ssub.s32 1, %s3
  %s6 = scalar_select 0, %s5, %s3
  $region1: #{tpu_custom_call.1} parent=0
    #allocation2 [shape = 'u8[8192]{0}', space=vmem, size = 0x2000, scoped, tag = 'output window, operand 0, single buffered']
    #allocation3 [shape = 's32[1]{0}', space=sflag, size = 0x4, scoped, tag = 'scoped memory for tpu_custom_call.1']
    %7 = vsyncpa [#allocation3], 0
    // Predicated region
    $region2: #{tpu_custom_call.1} parent=1 // pred_check
      _
    $region3: #{tpu_custom_call.1} parent=1 // pred_check_branch
      %9 = sbr.rel (0) target = $region5
    $region4: #{tpu_custom_call.1} parent=1 // pred_region
      _
    $region5: #{tpu_custom_call.1} parent=1 // pred_fallthru
      _
    // Predicated region
    $region6: #{tpu_custom_call.1} parent=1 // pred_check
      _
    $region7: #{tpu_custom_call.1} parent=1 // pred_check_branch
      %11 = sbr.rel (0) target = $region9
    $region8: #{tpu_custom_call.1} parent=1 // pred_region
      _
    $region9: #{tpu_custom_call.1} parent=1 // pred_fallthru
      _
    %v12 = vld [vmem:[%s0] sm:$0xff]
    %v13 = vld [vmem:[%s0 + $0x8] sm:$0xff]
    %v14 = vld [vmem:[%s1] sm:$0xff]
    %v15 = vld [vmem:[%s1 + $0x8] sm:$0xff]
    %17 = vset.pattern.permute.xlu0 0
    %18 = vperm.xlu0 %17, %v12
    %v19 = vpop.permute.xlu0 %18
    %v21 = vmul.f32 %v14, %v19
    %v22 = vmul.f32 %v15, %v19
    %24 = vset.pattern.permute.xlu0 0
    %25 = vperm.xlu0 %24, %v13
    %v26 = vpop.permute.xlu0 %25
    %v28 = vadd.f32 %v21, %v26
    %v29 = vadd.f32 %v22, %v26
    %v30 = vxor.u32 %v28, 2147483648
    %v31 = vxor.u32 %v29, 2147483648
    %v32 = vmul.f32 %v30, 1.442695
    %v33 = vpow.pop %v32
    %v34 = vmul.f32 %v31, 1.442695
    %v35 = vpow.pop %v34
    %v36 = vadd.f32 %v33, 1.0
    %v37 = vadd.f32 %v35, 1.0
    %v38 = vrcp.pop %v36
    %v39 = vmul.f32 1.0, %v38
    %v40 = vrcp.pop %v37
    %v41 = vmul.f32 1.0, %v40
    %v42 = vmul.f32 %v14, %v39
    %v43 = vmul.f32 %v15, %v41
    %44 = vst [vmem:[#allocation2] sm:$0xff] %v42
    %45 = vst [vmem:[#allocation2 + $0x8] sm:$0xff] %v43
    // Predicated region
    $region10: #{tpu_custom_call.1} parent=1 // pred_check
      _
    $region11: #{tpu_custom_call.1} parent=1 // pred_check_branch
      %47 = sbr.rel (0) target = $region13
    $region12: #{tpu_custom_call.1} parent=1 // pred_region
      %s49 = ssub.s32 256, 256
      %50 = vsyncadd [#allocation3], %s49
      %s52 = sshll.u32 [#allocation2], 4
      %s53 = int_to_ptr.vmem [resolvable:$true] %s52
      %55 = dma.vmem_to_hbm [thread:$0]  %s53, 256, %s2, [#allocation3]
    $region13: #{tpu_custom_call.1} parent=1 // pred_fallthru
      _
    // Predicated region
    $region14: #{tpu_custom_call.1} parent=1 // pred_check
      _
    $region15: #{tpu_custom_call.1} parent=1 // pred_check_branch
      %57 = sbr.rel (0) target = $region17
    $region16: #{tpu_custom_call.1} parent=1 // pred_region
      %58 = dma.done [#allocation3], 256
    $region17: #{tpu_custom_call.1} parent=1 // pred_fallthru
      _
    %59 = vsyncpa [#allocation3], 1

</llo_original>
